<compile_context>
chip_gen: v5e
topology: v5e:2x2
jax: 0.10.0
libtpu: 0.0.40
codegen_flags: <defaults>
</compile_context>

<pallas_src>
import jax
import jax.numpy as jnp
from jax.experimental import pallas as pl
from jax.experimental.pallas import tpu as pltpu


# ----------------------------- problem geometry ----------------------------- #
N, CIN, H, W = 2, 3, 16, 16          # input images (NCHW on the host side)
KH, KW = 3, 3                        # stem conv kernel
COUT = 32                            # stem width
COUT_PAD = 128                       # lane-dense channel dim (zero padded)
K_PAD = 128                          # lane/contraction dim for im2col (27 -> 128)
HW = H * W


# ------------------------------- Pallas kernel ------------------------------ #
def fused_classifier_kernel(patches_ref, wc_ref, bc_ref, wh_ref, bh_ref, out_ref):
    """Fused stem-conv (single im2col matmul) + bias + ReLU + GAP + linear head.

    patches_ref: (N*H*W, K_PAD)       lane-dense im2col patches       (VMEM)
    wc_ref     : (K_PAD, COUT_PAD)    merged conv weight              (VMEM)
    bc_ref     : (1, COUT_PAD)        conv bias                       (VMEM)
    wh_ref     : (COUT_PAD, COUT_PAD) head weight in column 0         (VMEM)
    bh_ref     : (1,)                 head bias (scalar)              (SMEM)
    out_ref    : (N, COUT_PAD)        logits in column 0, lane-dense  (VMEM)
    """
    # One MXU pass: (512, 128) @ (128, 128) -> f32.
    feat = jnp.dot(patches_ref[...], wc_ref[...],
                   preferred_element_type=jnp.float32)

    # bias + ReLU epilogue on the VPU (lane-dense, last dim 128).
    feat = jnp.maximum(feat + bc_ref[...], 0.0)               # (N*H*W, COUT_PAD)

    # Global average pool: per-image sublane reduction, no pooling matmul.
    pooled = jnp.sum(feat.reshape(N, HW, COUT_PAD), axis=1) * (1.0 / HW)  # (N, 128)

    # Linear head (num_classes=1) as a tiny matmul -> lane-dense store;
    # column 0 carries the logit, padded rows/cols of wh are zero.
    logits = jnp.dot(pooled, wh_ref[...],
                     preferred_element_type=jnp.float32) + bh_ref[0]
    out_ref[...] = logits                                     # (N, COUT_PAD)


# --------------------------------- wrapper ---------------------------------- #
def model_forward(x_nchw, conv_w, conv_b, head_w, head_b):
    """x_nchw: (N, CIN, H, W) float32.  Returns (N, 1) float32 logits."""
    n, cin, h, w = x_nchw.shape
    cout = conv_w.shape[0]
    k_true = KH * KW * cin

    # Trace-time prep (XLA fuses this into one small preceding fusion):
    # NHWC + spatial zero pad, then host-side im2col -> lane-dense (n*h*w, 128).
    x_nhwc = jnp.transpose(x_nchw, (0, 2, 3, 1))
    x_pad = jnp.pad(x_nhwc, ((0, 0), (1, 1), (1, 1), (0, 0)))
    taps = [x_pad[:, dh:dh + h, dw:dw + w, :]                  # (n, h, w, cin)
            for dh in range(KH) for dw in range(KW)]
    patches = jnp.stack(taps, axis=3).reshape(n * h * w, k_true)   # tap-major, ch-minor
    patches = jnp.pad(patches, ((0, 0), (0, K_PAD - k_true)))      # (n*h*w, 128)

    # Conv weight merged into one (K_PAD, COUT_PAD) matrix, same contraction order.
    wc = jnp.transpose(conv_w, (2, 3, 1, 0)).reshape(k_true, cout)
    wc = jnp.pad(wc, ((0, K_PAD - k_true), (0, COUT_PAD - cout)))  # (128, 128)
    bc = jnp.pad(conv_b, (0, COUT_PAD - cout)).reshape(1, COUT_PAD)

    # Head weight (cout, 1) placed in column 0 of a (COUT_PAD, COUT_PAD) matrix.
    wh = jnp.pad(head_w, ((0, COUT_PAD - cout), (0, COUT_PAD - 1)))
    bh = head_b.reshape(1,).astype(jnp.float32)

    # Advisory cost estimate (true, un-padded arithmetic).
    flops = (2 * n * h * w * k_true * cout      # conv matmul
             + 4 * n * h * w * cout             # bias + relu + pool adds
             + 2 * n * cout)                    # head
    bytes_accessed = 4 * (patches.size + wc.size + bc.size + wh.size
                          + bh.size + n * COUT_PAD)

    vmem = pl.BlockSpec(memory_space=pltpu.MemorySpace.VMEM)
    smem = pl.BlockSpec(memory_space=pltpu.MemorySpace.SMEM)

    out = pl.pallas_call(
        fused_classifier_kernel,
        out_shape=jax.ShapeDtypeStruct((n, COUT_PAD), jnp.float32),
        in_specs=[vmem, vmem, vmem, vmem, smem],
        out_specs=vmem,
        cost_estimate=pl.CostEstimate(flops=flops, transcendentals=0,
                                      bytes_accessed=bytes_accessed),
    )(patches, wc, bc, wh, bh)

    return out[:, :1]                                          # (n, 1) logits


# -------------------------------- reference --------------------------------- #
def reference_forward(x_nchw, conv_w, conv_b, head_w, head_b):
    y = jax.lax.conv_general_dilated(
        x_nchw, conv_w, window_strides=(1, 1), padding=((1, 1), (1, 1)),
        dimension_numbers=("NCHW", "OIHW", "NCHW"))
    y = y + conv_b.reshape(1, -1, 1, 1)
    y = jnp.maximum(y, 0.0)
    pooled = jnp.mean(y, axis=(2, 3))                          # (N, COUT)
    return pooled @ head_w + head_b.reshape(1, 1)


if __name__ == "__main__":
    key = jax.random.PRNGKey(0)
    kx, kw1, kb1, kw2, kb2 = jax.random.split(key, 5)

    x = jax.random.normal(kx, (N, CIN, H, W), dtype=jnp.float32)
    conv_w = jax.random.normal(kw1, (COUT, CIN, KH, KW), dtype=jnp.float32) * 0.1
    conv_b = jax.random.normal(kb1, (COUT,), dtype=jnp.float32) * 0.1
    head_w = jax.random.normal(kw2, (COUT, 1), dtype=jnp.float32) * 0.1
    head_b = jax.random.normal(kb2, (1,), dtype=jnp.float32) * 0.1

    out = model_forward(x, conv_w, conv_b, head_w, head_b)
    out = jax.block_until_ready(out)

    ref = reference_forward(x, conv_w, conv_b, head_w, head_b)
    assert out.shape == (N, 1)
    assert jnp.allclose(out, ref, atol=1e-4, rtol=1e-4), (out, ref)

    print("KERNEL_OK")
</pallas_src>

<mosaic_0001>
module attributes {stable_mosaic.version = 11 : i64} {
  func.func @fused_classifier_kernel(%arg0: memref<512x128xf32, #tpu.memory_space<vmem>>, %arg1: memref<128x128xf32, #tpu.memory_space<vmem>>, %arg2: memref<1x128xf32, #tpu.memory_space<vmem>>, %arg3: memref<128x128xf32, #tpu.memory_space<vmem>>, %arg4: memref<1xf32, #tpu.memory_space<smem>>, %arg5: memref<2x128xf32, #tpu.memory_space<vmem>>) attributes {dimension_semantics = [], scalar_prefetch = 0 : i64, scratch_operands = 0 : i64, tpu.core_type = #tpu.core_type<tc>} {
    %c0 = arith.constant 0 : index
    %c0_0 = arith.constant 0 : index
    %0 = vector.load %arg0[%c0, %c0_0] : memref<512x128xf32, #tpu.memory_space<vmem>>, vector<512x128xf32>
    %c0_1 = arith.constant 0 : index
    %c0_2 = arith.constant 0 : index
    %1 = vector.load %arg1[%c0_1, %c0_2] : memref<128x128xf32, #tpu.memory_space<vmem>>, vector<128x128xf32>
    %cst = arith.constant dense<0.000000e+00> : vector<512x128xf32>
    %2 = tpu.matmul %0, %1, %cst {dimension_numbers = #tpu.dot_dimension_numbers<[1], [0], [0], [1], [0, 0, 1, 1], [], []>} : vector<512x128xf32>, vector<128x128xf32>, vector<512x128xf32> -> vector<512x128xf32>
    %c0_3 = arith.constant 0 : index
    %c0_4 = arith.constant 0 : index
    %3 = vector.load %arg2[%c0_3, %c0_4] : memref<1x128xf32, #tpu.memory_space<vmem>>, vector<1x128xf32>
    %4 = vector.broadcast %3 : vector<1x128xf32> to vector<512x128xf32>
    %5 = arith.addf %2, %4 : vector<512x128xf32>
    %cst_5 = arith.constant 0.000000e+00 : f32
    %6 = vector.broadcast %cst_5 : f32 to vector<512x128xf32>
    %7 = arith.maximumf %5, %6 : vector<512x128xf32>
    %8 = vector.shape_cast %7 : vector<512x128xf32> to vector<2x256x128xf32>
    %cst_6 = arith.constant dense<0.000000e+00> : vector<2x128xf32>
    %9 = vector.multi_reduction <add>, %8, %cst_6 [1] : vector<2x256x128xf32> to vector<2x128xf32>
    %cst_7 = arith.constant 3.906250e-03 : f32
    %10 = vector.broadcast %cst_7 : f32 to vector<2x128xf32>
    %11 = arith.mulf %9, %10 : vector<2x128xf32>
    %c0_8 = arith.constant 0 : index
    %c0_9 = arith.constant 0 : index
    %12 = vector.load %arg3[%c0_8, %c0_9] : memref<128x128xf32, #tpu.memory_space<vmem>>, vector<128x128xf32>
    %cst_10 = arith.constant dense<0.000000e+00> : vector<2x128xf32>
    %13 = tpu.matmul %11, %12, %cst_10 {dimension_numbers = #tpu.dot_dimension_numbers<[1], [0], [0], [1], [0, 0, 1, 1], [], []>} : vector<2x128xf32>, vector<128x128xf32>, vector<2x128xf32> -> vector<2x128xf32>
    %c0_11 = arith.constant 0 : index
    %14 = memref.load %arg4[%c0_11] : memref<1xf32, #tpu.memory_space<smem>>
    %15 = vector.broadcast %14 : f32 to vector<2x128xf32>
    %16 = arith.addf %13, %15 : vector<2x128xf32>
    %c0_12 = arith.constant 0 : index
    %c0_13 = arith.constant 0 : index
    %17 = vector.load %arg5[%c0_12, %c0_13] : memref<2x128xf32, #tpu.memory_space<vmem>>, vector<2x128xf32>
    tpu.vector_store %arg5[%c0_12, %c0_13], %16 {strides = array<i32>} : memref<2x128xf32, #tpu.memory_space<vmem>>, vector<2x128xf32>,
    return
  }
}

</mosaic_0001>

<llo_original>
// kernel: tpu_custom_call.1
$region0: #{tpu_custom_call.1}
  #allocation0 [shape = 'u32[]', space=smem, size = 0x4, offset = 0x4, fixed_abs, tag = 'smem constant byte address 0x4 - core index']
  #allocation1 [shape = 'u32[72,128]{1,0:T(1,128)}', space=vmem, size = 0x9000, scoped, tag = 'internal scratch']
  #allocation2 [shape = 'f32[1]{0:T(128)S(6)}', space=smem, size = 0x200, scoped, tag = 'scoped memory for tpu_custom_call.1']
  %s0 = inlined_call_operand.hbm [shape: f32[512,128], index: 0, kind: input, shape index: {}]
  %s1 = inlined_call_operand.hbm [shape: f32[128,128], index: 1, kind: input, shape index: {}]
  %s2 = inlined_call_operand.vmem [shape: f32[1,128], index: 2, kind: input, shape index: {}]
  %s3 = inlined_call_operand.hbm [shape: f32[128,128], index: 3, kind: input, shape index: {}]
  %s4 = inlined_call_operand.<no memory space> [shape: f32[1], index: 4, kind: input, shape index: {}]
  %s5 = inlined_call_operand.hbm [shape: f32[2,128], index: 5, kind: output, shape index: {}]
  %s6 = sld [smem:[#allocation0]]
  $region42: #{tpu_custom_call.1} parent=0
    _
  %s8 = ssub.s32 1, %s6
  %s9 = scalar_select 0, %s8, %s6
  %10 = sst [smem:[#allocation2]] %s4
  $region1: #{tpu_custom_call.1} parent=0
    #allocation3 [shape = 'u8[262144]{0}', space=vmem, size = 0x40000, scoped, tag = 'input window, operand 0, single buffered']
    #allocation4 [shape = 's32[1]{0}', space=sflag, size = 0x4, scoped, tag = 'scoped memory for tpu_custom_call.1']
    #allocation5 [shape = 's32[1]{0}', space=sflag, size = 0x4, scoped, tag = 'scoped memory for tpu_custom_call.1']
    #allocation6 [shape = 'u8[65536]{0}', space=vmem, size = 0x10000, scoped, tag = 'input window, operand 1, single buffered']
    #allocation7 [shape = 's32[1]{0}', space=sflag, size = 0x4, scoped, tag = 'scoped memory for tpu_custom_call.1']
    #allocation8 [shape = 'u8[65536]{0}', space=vmem, size = 0x10000, scoped, tag = 'input window, operand 3, single buffered']
    #allocation9 [shape = 'u8[1024]{0}', space=vmem, size = 0x400, scoped, tag = 'output window, operand 0, single buffered']
    %11 = vsyncpa [#allocation4], 0
    %12 = vsyncpa [#allocation7], 0
    %13 = vsyncpa [#allocation5], 0
    // Predicated region
    $region2: #{tpu_custom_call.1} parent=1 // pred_check
      _
    $region3: #{tpu_custom_call.1} parent=1 // pred_check_branch
      %15 = sbr.rel (0) target = $region5
    $region4: #{tpu_custom_call.1} parent=1 // pred_region
      %17 = vsyncadd [#allocation4], 0
      %s18 = sshll.u32 %s0, 4
      %s19 = int_to_ptr.hbm [resolvable:$true] %s18
      %s20 = sshll.u32 [#allocation3], 4
      %s21 = int_to_ptr.vmem [resolvable:$true] %s20
      %26 = dma.hbm_to_vmem [thread:$0]  %s19, 8192, %s21, [#allocation4], 128, 128, 8
    $region5: #{tpu_custom_call.1} parent=1 // pred_fallthru
      _
    // Predicated region
    $region6: #{tpu_custom_call.1} parent=1 // pred_check
      _
    $region7: #{tpu_custom_call.1} parent=1 // pred_check_branch
      %28 = sbr.rel (0) target = $region9
    $region8: #{tpu_custom_call.1} parent=1 // pred_region
      %30 = vsyncadd [#allocation7], 0
      %s31 = sshll.u32 %s1, 4
      %s32 = int_to_ptr.hbm [resolvable:$true] %s31
      %s33 = sshll.u32 [#allocation6], 4
      %s34 = int_to_ptr.vmem [resolvable:$true] %s33
      %39 = dma.hbm_to_vmem [thread:$0]  %s32, 2048, %s34, [#allocation7], 128, 128, 8
    $region9: #{tpu_custom_call.1} parent=1 // pred_fallthru
      _
    // Predicated region
    $region10: #{tpu_custom_call.1} parent=1 // pred_check
      _
    $region11: #{tpu_custom_call.1} parent=1 // pred_check_branch
      %41 = sbr.rel (0) target = $region13
    $region12: #{tpu_custom_call.1} parent=1 // pred_region
      _
    $region13: #{tpu_custom_call.1} parent=1 // pred_fallthru
      _
    // Predicated region
    $region14: #{tpu_custom_call.1} parent=1 // pred_check
      _
    $region15: #{tpu_custom_call.1} parent=1 // pred_check_branch
      %43 = sbr.rel (0) target = $region17
    $region16: #{tpu_custom_call.1} parent=1 // pred_region
      %45 = vsyncadd [#allocation7], 0
      %s46 = sshll.u32 %s3, 4
      %s47 = int_to_ptr.hbm [resolvable:$true] %s46
      %s48 = sshll.u32 [#allocation8], 4
      %s49 = int_to_ptr.vmem [resolvable:$true] %s48
      %54 = dma.hbm_to_vmem [thread:$0]  %s47, 2048, %s49, [#allocation7], 128, 128, 8
    $region17: #{tpu_custom_call.1} parent=1 // pred_fallthru
      _
    // Predicated region
    $region18: #{tpu_custom_call.1} parent=1 // pred_check
      _
    $region19: #{tpu_custom_call.1} parent=1 // pred_check_branch
      %56 = sbr.rel (0) target = $region21
    $region20: #{tpu_custom_call.1} parent=1 // pred_region
      _
    $region21: #{tpu_custom_call.1} parent=1 // pred_fallthru
      _
    // Predicated region
    $region22: #{tpu_custom_call.1} parent=1 // pred_check
      _
    $region23: #{tpu_custom_call.1} parent=1 // pred_check_branch
      %58 = sbr.rel (0) target = $region25
    $region24: #{tpu_custom_call.1} parent=1 // pred_region
      %60 = dma.done [#allocation4], 8192
    $region25: #{tpu_custom_call.1} parent=1 // pred_fallthru
      _
    // Predicated region
    $region26: #{tpu_custom_call.1} parent=1 // pred_check
      _
    $region27: #{tpu_custom_call.1} parent=1 // pred_check_branch
      %62 = sbr.rel (0) target = $region29
    $region28: #{tpu_custom_call.1} parent=1 // pred_region
      %64 = dma.done [#allocation7], 2048
    $region29: #{tpu_custom_call.1} parent=1 // pred_fallthru
      _
    // Predicated region
    $region30: #{tpu_custom_call.1} parent=1 // pred_check
      _
    $region31: #{tpu_custom_call.1} parent=1 // pred_check_branch
      %66 = sbr.rel (0) target = $region33
    $region32: #{tpu_custom_call.1} parent=1 // pred_region
      %68 = dma.done [#allocation7], 2048
    $region33: #{tpu_custom_call.1} parent=1 // pred_fallthru
      _
    %v69 = vld [vmem:[#allocation3] sm:$0xff]
    %v70 = vld [vmem:[#allocation3 + $0x8] sm:$0xff]
    %v71 = vld [vmem:[#allocation3 + $0x10] sm:$0xff]
    %v72 = vld [vmem:[#allocation3 + $0x18] sm:$0xff]
    %v73 = vld [vmem:[#allocation3 + $0x20] sm:$0xff]
    %v74 = vld [vmem:[#allocation3 + $0x28] sm:$0xff]
    %v75 = vld [vmem:[#allocation3 + $0x30] sm:$0xff]
    %v76 = vld [vmem:[#allocation3 + $0x38] sm:$0xff]
    %v77 = vld [vmem:[#allocation3 + $0x40] sm:$0xff]
    %v78 = vld [vmem:[#allocation3 + $0x48] sm:$0xff]
    %v79 = vld [vmem:[#allocation3 + $0x50] sm:$0xff]
    %v80 = vld [vmem:[#allocation3 + $0x58] sm:$0xff]
    %v81 = vld [vmem:[#allocation3 + $0x60] sm:$0xff]
    %v82 = vld [vmem:[#allocation3 + $0x68] sm:$0xff]
    %v83 = vld [vmem:[#allocation3 + $0x70] sm:$0xff]
    %v84 = vld [vmem:[#allocation3 + $0x78] sm:$0xff]
    %v85 = vld [vmem:[#allocation3 + $0x80] sm:$0xff]
    %v86 = vld [vmem:[#allocation3 + $0x88] sm:$0xff]
    %v87 = vld [vmem:[#allocation3 + $0x90] sm:$0xff]
    %v88 = vld [vmem:[#allocation3 + $0x98] sm:$0xff]
    %v89 = vld [vmem:[#allocation3 + $0xa0] sm:$0xff]
    %v90 = vld [vmem:[#allocation3 + $0xa8] sm:$0xff]
    %v91 = vld [vmem:[#allocation3 + $0xb0] sm:$0xff]
    %v92 = vld [vmem:[#allocation3 + $0xb8] sm:$0xff]
    %v93 = vld [vmem:[#allocation3 + $0xc0] sm:$0xff]
    %v94 = vld [vmem:[#allocation3 + $0xc8] sm:$0xff]
    %v95 = vld [vmem:[#allocation3 + $0xd0] sm:$0xff]
    %v96 = vld [vmem:[#allocation3 + $0xd8] sm:$0xff]
    %v97 = vld [vmem:[#allocation3 + $0xe0] sm:$0xff]
    %v98 = vld [vmem:[#allocation3 + $0xe8] sm:$0xff]
    %v99 = vld [vmem:[#allocation3 + $0xf0] sm:$0xff]
    %v100 = vld [vmem:[#allocation3 + $0xf8] sm:$0xff]
    %v101 = vld [vmem:[#allocation3 + $0x100] sm:$0xff]
    %v102 = vld [vmem:[#allocation3 + $0x108] sm:$0xff]
    %v103 = vld [vmem:[#allocation3 + $0x110] sm:$0xff]
    %v104 = vld [vmem:[#allocation3 + $0x118] sm:$0xff]
    %v105 = vld [vmem:[#allocation3 + $0x120] sm:$0xff]
    %v106 = vld [vmem:[#allocation3 + $0x128] sm:$0xff]
    %v107 = vld [vmem:[#allocation3 + $0x130] sm:$0xff]
    %v108 = vld [vmem:[#allocation3 + $0x138] sm:$0xff]
    %v109 = vld [vmem:[#allocation3 + $0x140] sm:$0xff]
    %v110 = vld [vmem:[#allocation3 + $0x148] sm:$0xff]
    %v111 = vld [vmem:[#allocation3 + $0x150] sm:$0xff]
    %v112 = vld [vmem:[#allocation3 + $0x158] sm:$0xff]
    %v113 = vld [vmem:[#allocation3 + $0x160] sm:$0xff]
    %v114 = vld [vmem:[#allocation3 + $0x168] sm:$0xff]
    %v115 = vld [vmem:[#allocation3 + $0x170] sm:$0xff]
    %v116 = vld [vmem:[#allocation3 + $0x178] sm:$0xff]
    %v117 = vld [vmem:[#allocation3 + $0x180] sm:$0xff]
    %v118 = vld [vmem:[#allocation3 + $0x188] sm:$0xff]
    %v119 = vld [vmem:[#allocation3 + $0x190] sm:$0xff]
    %v120 = vld [vmem:[#allocation3 + $0x198] sm:$0xff]
    %v121 = vld [vmem:[#allocation3 + $0x1a0] sm:$0xff]
    %v122 = vld [vmem:[#allocation3 + $0x1a8] sm:$0xff]
    %v123 = vld [vmem:[#allocation3 + $0x1b0] sm:$0xff]
    %v124 = vld [vmem:[#allocation3 + $0x1b8] sm:$0xff]
    %v125 = vld [vmem:[#allocation3 + $0x1c0] sm:$0xff]
    %v126 = vld [vmem:[#allocation3 + $0x1c8] sm:$0xff]
    %v127 = vld [vmem:[#allocation3 + $0x1d0] sm:$0xff]
    %v128 = vld [vmem:[#allocation3 + $0x1d8] sm:$0xff]
    %v129 = vld [vmem:[#allocation3 + $0x1e0] sm:$0xff]
    %v130 = vld [vmem:[#allocation3 + $0x1e8] sm:$0xff]
    %v131 = vld [vmem:[#allocation3 + $0x1f0] sm:$0xff]
    %v132 = vld [vmem:[#allocation3 + $0x1f8] sm:$0xff]
    %v133 = vld [vmem:[#allocation6] sm:$0xff]
    %v134 = vld [vmem:[#allocation6 + $0x8] sm:$0xff]
    %v135 = vld [vmem:[#allocation6 + $0x10] sm:$0xff]
    %v136 = vld [vmem:[#allocation6 + $0x18] sm:$0xff]
    %v137 = vld [vmem:[#allocation6 + $0x20] sm:$0xff]
    %v138 = vld [vmem:[#allocation6 + $0x28] sm:$0xff]
    %v139 = vld [vmem:[#allocation6 + $0x30] sm:$0xff]
    %v140 = vld [vmem:[#allocation6 + $0x38] sm:$0xff]
    %v141 = vld [vmem:[#allocation6 + $0x40] sm:$0xff]
    %v142 = vld [vmem:[#allocation6 + $0x48] sm:$0xff]
    %v143 = vld [vmem:[#allocation6 + $0x50] sm:$0xff]
    %v144 = vld [vmem:[#allocation6 + $0x58] sm:$0xff]
    %v145 = vld [vmem:[#allocation6 + $0x60] sm:$0xff]
    %v146 = vld [vmem:[#allocation6 + $0x68] sm:$0xff]
    %v147 = vld [vmem:[#allocation6 + $0x70] sm:$0xff]
    %v148 = vld [vmem:[#allocation6 + $0x78] sm:$0xff]
    %v149 = vld [vmem:[%s2] sm:$0x1]
    %v151 = vperm.slane %v149, 0
    %153 = vmatpush.msra.mxu0 %v148
    %154 = vmatpush.msra.mxu0 %v147
    %155 = vmatpush.msra.mxu0 %v146
    %156 = vmatpush.msra.mxu0 %v145
    %157 = vmatpush.msra.mxu0 %v144
    %158 = vmatpush.msra.mxu0 %v143
    %159 = vmatpush.msra.mxu0 %v142
    %160 = vmatpush.msra.mxu0 %v141
    %161 = vmatpush.msra.mxu0 %v140
    %162 = vmatpush.msra.mxu0 %v139
    %163 = vmatpush.msra.mxu0 %v138
    %164 = vmatpush.msra.mxu0 %v137
    %165 = vmatpush.msra.mxu0 %v136
    %166 = vmatpush.msra.mxu0 %v135
    %167 = vmatpush.msra.mxu0 %v134
    %168 = vmatpush.msra.mxu0 %v133
    %169 = vmatmul.f32.gmra.mxu0 %v69
    %v170 = vpop.f32.mrf.mxu0
    %v171 = vadd.f32 %v151, %v170
    %172 = vmatmul.f32.gmra.mxu0 %v70
    %v173 = vpop.f32.mrf.mxu0
    %v174 = vadd.f32 %v151, %v173
    %175 = vmatmul.f32.gmra.mxu0 %v71
    %v176 = vpop.f32.mrf.mxu0
    %v177 = vadd.f32 %v151, %v176
    %178 = vmatmul.f32.gmra.mxu0 %v72
    %v179 = vpop.f32.mrf.mxu0
    %v180 = vadd.f32 %v151, %v179
    %181 = vmatmul.f32.gmra.mxu0 %v73
    %v182 = vpop.f32.mrf.mxu0
    %v183 = vadd.f32 %v151, %v182
    %184 = vmatmul.f32.gmra.mxu0 %v74
    %v185 = vpop.f32.mrf.mxu0
    %v186 = vadd.f32 %v151, %v185
    %187 = vmatmul.f32.gmra.mxu0 %v75
    %v188 = vpop.f32.mrf.mxu0
    %v189 = vadd.f32 %v151, %v188
    %190 = vmatmul.f32.gmra.mxu0 %v76
    %v191 = vpop.f32.mrf.mxu0
    %v192 = vadd.f32 %v151, %v191
    %193 = vmatmul.f32.gmra.mxu0 %v77
    %v194 = vpop.f32.mrf.mxu0
    %v195 = vadd.f32 %v151, %v194
    %196 = vmatmul.f32.gmra.mxu0 %v78
    %v197 = vpop.f32.mrf.mxu0
    %v198 = vadd.f32 %v151, %v197
    %199 = vmatmul.f32.gmra.mxu0 %v79
    %v200 = vpop.f32.mrf.mxu0
    %v201 = vadd.f32 %v151, %v200
    %202 = vmatmul.f32.gmra.mxu0 %v80
    %v203 = vpop.f32.mrf.mxu0
    %v204 = vadd.f32 %v151, %v203
    %205 = vmatmul.f32.gmra.mxu0 %v81
    %v206 = vpop.f32.mrf.mxu0
    %v207 = vadd.f32 %v151, %v206
    %208 = vmatmul.f32.gmra.mxu0 %v82
    %v209 = vpop.f32.mrf.mxu0
    %v210 = vadd.f32 %v151, %v209
    %211 = vmatmul.f32.gmra.mxu0 %v83
    %v212 = vpop.f32.mrf.mxu0
    %v213 = vadd.f32 %v151, %v212
    %214 = vmatmul.f32.gmra.mxu0 %v84
    %v215 = vpop.f32.mrf.mxu0
    %v216 = vadd.f32 %v151, %v215
    %217 = vmatmul.f32.gmra.mxu0 %v85
    %v218 = vpop.f32.mrf.mxu0
    %v219 = vadd.f32 %v151, %v218
    %220 = vmatmul.f32.gmra.mxu0 %v86
    %v221 = vpop.f32.mrf.mxu0
    %v222 = vadd.f32 %v151, %v221
    %223 = vmatmul.f32.gmra.mxu0 %v87
    %v224 = vpop.f32.mrf.mxu0
    %v225 = vadd.f32 %v151, %v224
    %226 = vmatmul.f32.gmra.mxu0 %v88
    %v227 = vpop.f32.mrf.mxu0
    %v228 = vadd.f32 %v151, %v227
    %229 = vmatmul.f32.gmra.mxu0 %v89
    %v230 = vpop.f32.mrf.mxu0
    %v231 = vadd.f32 %v151, %v230
    %232 = vmatmul.f32.gmra.mxu0 %v90
    %v233 = vpop.f32.mrf.mxu0
    %v234 = vadd.f32 %v151, %v233
    %235 = vmatmul.f32.gmra.mxu0 %v91
    %v236 = vpop.f32.mrf.mxu0
    %v237 = vadd.f32 %v151, %v236
    %238 = vmatmul.f32.gmra.mxu0 %v92
    %v239 = vpop.f32.mrf.mxu0
    %v240 = vadd.f32 %v151, %v239
    %241 = vmatmul.f32.gmra.mxu0 %v93
    %v242 = vpop.f32.mrf.mxu0
    %v243 = vadd.f32 %v151, %v242
    %244 = vmatmul.f32.gmra.mxu0 %v94
    %v245 = vpop.f32.mrf.mxu0
    %v246 = vadd.f32 %v151, %v245
    %247 = vmatmul.f32.gmra.mxu0 %v95
    %v248 = vpop.f32.mrf.mxu0
    %v249 = vadd.f32 %v151, %v248
    %250 = vmatmul.f32.gmra.mxu0 %v96
    %v251 = vpop.f32.mrf.mxu0
    %v252 = vadd.f32 %v151, %v251
    %253 = vmatmul.f32.gmra.mxu0 %v97
    %v254 = vpop.f32.mrf.mxu0
    %v255 = vadd.f32 %v151, %v254
    %256 = vmatmul.f32.gmra.mxu0 %v98
    %v257 = vpop.f32.mrf.mxu0
    %v258 = vadd.f32 %v151, %v257
    %259 = vmatmul.f32.gmra.mxu0 %v99
    %v260 = vpop.f32.mrf.mxu0
    %v261 = vadd.f32 %v151, %v260
    %262 = vmatmul.f32.gmra.mxu0 %v100
    %v263 = vpop.f32.mrf.mxu0
    %v264 = vadd.f32 %v151, %v263
    %265 = vmatmul.f32.gmra.mxu0 %v101
    %v266 = vpop.f32.mrf.mxu0
    %v267 = vadd.f32 %v151, %v266
    %268 = vmatmul.f32.gmra.mxu0 %v102
    %v269 = vpop.f32.mrf.mxu0
    %v270 = vadd.f32 %v151, %v269
    %271 = vmatmul.f32.gmra.mxu0 %v103
    %v272 = vpop.f32.mrf.mxu0
    %v273 = vadd.f32 %v151, %v272
    %274 = vmatmul.f32.gmra.mxu0 %v104
    %v275 = vpop.f32.mrf.mxu0
    %v276 = vadd.f32 %v151, %v275
    %277 = vmatmul.f32.gmra.mxu0 %v105
    %v278 = vpop.f32.mrf.mxu0
    %v279 = vadd.f32 %v151, %v278
    %280 = vmatmul.f32.gmra.mxu0 %v106
    %v281 = vpop.f32.mrf.mxu0
    %v282 = vadd.f32 %v151, %v281
    %283 = vmatmul.f32.gmra.mxu0 %v107
    %v284 = vpop.f32.mrf.mxu0
    %v285 = vadd.f32 %v151, %v284
    %286 = vmatmul.f32.gmra.mxu0 %v108
    %v287 = vpop.f32.mrf.mxu0
    %v288 = vadd.f32 %v151, %v287
    %289 = vmatmul.f32.gmra.mxu0 %v109
    %v290 = vpop.f32.mrf.mxu0
    %v291 = vadd.f32 %v151, %v290
    %292 = vmatmul.f32.gmra.mxu0 %v110
    %v293 = vpop.f32.mrf.mxu0
    %v294 = vadd.f32 %v151, %v293
    %295 = vmatmul.f32.gmra.mxu0 %v111
    %v296 = vpop.f32.mrf.mxu0
    %v297 = vadd.f32 %v151, %v296
    %298 = vmatmul.f32.gmra.mxu0 %v112
    %v299 = vpop.f32.mrf.mxu0
    %v300 = vadd.f32 %v151, %v299
    %301 = vmatmul.f32.gmra.mxu0 %v113
    %v302 = vpop.f32.mrf.mxu0
    %v303 = vadd.f32 %v151, %v302
    %304 = vmatmul.f32.gmra.mxu0 %v114
    %v305 = vpop.f32.mrf.mxu0
    %v306 = vadd.f32 %v151, %v305
    %307 = vmatmul.f32.gmra.mxu0 %v115
    %v308 = vpop.f32.mrf.mxu0
    %v309 = vadd.f32 %v151, %v308
    %310 = vmatmul.f32.gmra.mxu0 %v116
    %v311 = vpop.f32.mrf.mxu0
    %v312 = vadd.f32 %v151, %v311
    %313 = vmatmul.f32.gmra.mxu0 %v117
    %v314 = vpop.f32.mrf.mxu0
    %v315 = vadd.f32 %v151, %v314
    %316 = vmatmul.f32.gmra.mxu0 %v118
    %v317 = vpop.f32.mrf.mxu0
    %v318 = vadd.f32 %v151, %v317
    %319 = vmatmul.f32.gmra.mxu0 %v119
    %v320 = vpop.f32.mrf.mxu0
    %v321 = vadd.f32 %v151, %v320
    %322 = vmatmul.f32.gmra.mxu0 %v120
    %v323 = vpop.f32.mrf.mxu0
    %v324 = vadd.f32 %v151, %v323
    %325 = vmatmul.f32.gmra.mxu0 %v121
    %v326 = vpop.f32.mrf.mxu0
    %v327 = vadd.f32 %v151, %v326
    %328 = vmatmul.f32.gmra.mxu0 %v122
    %v329 = vpop.f32.mrf.mxu0
    %v330 = vadd.f32 %v151, %v329
    %331 = vmatmul.f32.gmra.mxu0 %v123
    %v332 = vpop.f32.mrf.mxu0
    %v333 = vadd.f32 %v151, %v332
    %334 = vmatmul.f32.gmra.mxu0 %v124
    %v335 = vpop.f32.mrf.mxu0
    %v336 = vadd.f32 %v151, %v335
    %337 = vmatmul.f32.gmra.mxu0 %v125
    %v338 = vpop.f32.mrf.mxu0
    %v339 = vadd.f32 %v151, %v338
    %340 = vmatmul.f32.gmra.mxu0 %v126
    %v341 = vpop.f32.mrf.mxu0
    %v342 = vadd.f32 %v151, %v341
    %343 = vmatmul.f32.gmra.mxu0 %v127
    %v344 = vpop.f32.mrf.mxu0
    %v345 = vadd.f32 %v151, %v344
    %346 = vmatmul.f32.gmra.mxu0 %v128
    %v347 = vpop.f32.mrf.mxu0
    %v348 = vadd.f32 %v151, %v347
    %349 = vmatmul.f32.gmra.mxu0 %v129
    %v350 = vpop.f32.mrf.mxu0
    %v351 = vadd.f32 %v151, %v350
    %352 = vmatmul.f32.gmra.mxu0 %v130
    %v353 = vpop.f32.mrf.mxu0
    %v354 = vadd.f32 %v151, %v353
    %355 = vmatmul.f32.gmra.mxu0 %v131
    %v356 = vpop.f32.mrf.mxu0
    %v357 = vadd.f32 %v151, %v356
    %358 = vmatmul.f32.gmra.mxu0 %v132
    %v359 = vpop.f32.mrf.mxu0
    %v360 = vadd.f32 %v151, %v359
    %361 = vdwg.mxu0
    %v362 = vmax.f32 %v171, 0.0
    %v363 = vmax.f32 %v174, 0.0
    %v364 = vmax.f32 %v177, 0.0
    %v365 = vmax.f32 %v180, 0.0
    %v366 = vmax.f32 %v183, 0.0
    %v367 = vmax.f32 %v186, 0.0
    %v368 = vmax.f32 %v189, 0.0
    %v369 = vmax.f32 %v192, 0.0
    %v370 = vmax.f32 %v195, 0.0
    %v371 = vmax.f32 %v198, 0.0
    %v372 = vmax.f32 %v201, 0.0
    %v373 = vmax.f32 %v204, 0.0
    %v374 = vmax.f32 %v207, 0.0
    %v375 = vmax.f32 %v210, 0.0
    %v376 = vmax.f32 %v213, 0.0
    %v377 = vmax.f32 %v216, 0.0
    %v378 = vmax.f32 %v219, 0.0
    %v379 = vmax.f32 %v222, 0.0
    %v380 = vmax.f32 %v225, 0.0
    %v381 = vmax.f32 %v228, 0.0
    %v382 = vmax.f32 %v231, 0.0
    %v383 = vmax.f32 %v234, 0.0
    %v384 = vmax.f32 %v237, 0.0
    %v385 = vmax.f32 %v240, 0.0
    %v386 = vmax.f32 %v243, 0.0
    %v387 = vmax.f32 %v246, 0.0
    %v388 = vmax.f32 %v249, 0.0
    %v389 = vmax.f32 %v252, 0.0
    %v390 = vmax.f32 %v255, 0.0
    %v391 = vmax.f32 %v258, 0.0
    %v392 = vmax.f32 %v261, 0.0
    %v393 = vmax.f32 %v264, 0.0
    %v394 = vmax.f32 %v267, 0.0
    %v395 = vmax.f32 %v270, 0.0
    %v396 = vmax.f32 %v273, 0.0
    %v397 = vmax.f32 %v276, 0.0
    %v398 = vmax.f32 %v279, 0.0
    %v399 = vmax.f32 %v282, 0.0
    %v400 = vmax.f32 %v285, 0.0
    %v401 = vmax.f32 %v288, 0.0
    %v402 = vmax.f32 %v291, 0.0
    %v403 = vmax.f32 %v294, 0.0
    %v404 = vmax.f32 %v297, 0.0
    %v405 = vmax.f32 %v300, 0.0
    %v406 = vmax.f32 %v303, 0.0
    %v407 = vmax.f32 %v306, 0.0
    %v408 = vmax.f32 %v309, 0.0
    %v409 = vmax.f32 %v312, 0.0
    %v410 = vmax.f32 %v315, 0.0
    %v411 = vmax.f32 %v318, 0.0
    %v412 = vmax.f32 %v321, 0.0
    %v413 = vmax.f32 %v324, 0.0
    %v414 = vmax.f32 %v327, 0.0
    %v415 = vmax.f32 %v330, 0.0
    %v416 = vmax.f32 %v333, 0.0
    %v417 = vmax.f32 %v336, 0.0
    %v418 = vmax.f32 %v339, 0.0
    %v419 = vmax.f32 %v342, 0.0
    %v420 = vmax.f32 %v345, 0.0
    %v421 = vmax.f32 %v348, 0.0
    %v422 = vmax.f32 %v351, 0.0
    %v423 = vmax.f32 %v354, 0.0
    %v424 = vmax.f32 %v357, 0.0
    %v425 = vmax.f32 %v360, 0.0
    %v426 = vadd.f32 %v362, %v363
    %v427 = vadd.f32 %v426, %v364
    %v428 = vadd.f32 %v427, %v365
    %v429 = vadd.f32 %v428, %v366
    %v430 = vadd.f32 %v429, %v367
    %v431 = vadd.f32 %v430, %v368
    %v432 = vadd.f32 %v431, %v369
    %v433 = vadd.f32 %v432, %v370
    %v434 = vadd.f32 %v433, %v371
    %v435 = vadd.f32 %v434, %v372
    %v436 = vadd.f32 %v435, %v373
    %v437 = vadd.f32 %v436, %v374
    %v438 = vadd.f32 %v437, %v375
    %v439 = vadd.f32 %v438, %v376
    %v440 = vadd.f32 %v439, %v377
    %v441 = vadd.f32 %v440, %v378
    %v442 = vadd.f32 %v441, %v379
    %v443 = vadd.f32 %v442, %v380
    %v444 = vadd.f32 %v443, %v381
    %v445 = vadd.f32 %v444, %v382
    %v446 = vadd.f32 %v445, %v383
    %v447 = vadd.f32 %v446, %v384
    %v448 = vadd.f32 %v447, %v385
    %v449 = vadd.f32 %v448, %v386
    %v450 = vadd.f32 %v449, %v387
    %v451 = vadd.f32 %v450, %v388
    %v452 = vadd.f32 %v451, %v389
    %v453 = vadd.f32 %v452, %v390
    %v454 = vadd.f32 %v453, %v391
    %v455 = vadd.f32 %v454, %v392
    %v456 = vadd.f32 %v455, %v393
    %v457 = vrot.slane %v456, 4
    %v458 = vadd.f32 %v456, %v457
    %v459 = vrot.slane %v458, 2
    %v460 = vadd.f32 %v458, %v459
    %v461 = vrot.slane %v460, 1
    %v462 = vadd.f32 %v460, %v461
    %v463 = vadd.f32 %v394, %v395
    %v464 = vadd.f32 %v463, %v396
    %v465 = vadd.f32 %v464, %v397
    %v466 = vadd.f32 %v465, %v398
    %v467 = vadd.f32 %v466, %v399
    %v468 = vadd.f32 %v467, %v400
    %v469 = vadd.f32 %v468, %v401
    %v470 = vadd.f32 %v469, %v402
    %v471 = vadd.f32 %v470, %v403
    %v472 = vadd.f32 %v471, %v404
    %v473 = vadd.f32 %v472, %v405
    %v474 = vadd.f32 %v473, %v406
    %v475 = vadd.f32 %v474, %v407
    %v476 = vadd.f32 %v475, %v408
    %v477 = vadd.f32 %v476, %v409
    %v478 = vadd.f32 %v477, %v410
    %v479 = vadd.f32 %v478, %v411
    %v480 = vadd.f32 %v479, %v412
    %v481 = vadd.f32 %v480, %v413
    %v482 = vadd.f32 %v481, %v414
    %v483 = vadd.f32 %v482, %v415
    %v484 = vadd.f32 %v483, %v416
    %v485 = vadd.f32 %v484, %v417
    %v486 = vadd.f32 %v485, %v418
    %v487 = vadd.f32 %v486, %v419
    %v488 = vadd.f32 %v487, %v420
    %v489 = vadd.f32 %v488, %v421
    %v490 = vadd.f32 %v489, %v422
    %v491 = vadd.f32 %v490, %v423
    %v492 = vadd.f32 %v491, %v424
    %v493 = vadd.f32 %v492, %v425
    %v494 = vrot.slane %v493, 4
    %v495 = vadd.f32 %v493, %v494
    %v496 = vrot.slane %v495, 2
    %v497 = vadd.f32 %v495, %v496
    %v498 = vrot.slane %v497, 1
    %v499 = vadd.f32 %v497, %v498
    %v500 = vmul.f32 %v462, 0.00390625
    %v501 = vmul.f32 %v499, 0.00390625
    %v502 = vld [vmem:[#allocation8] sm:$0xff]
    %v503 = vld [vmem:[#allocation8 + $0x8] sm:$0xff]
    %v504 = vld [vmem:[#allocation8 + $0x10] sm:$0xff]
    %v505 = vld [vmem:[#allocation8 + $0x18] sm:$0xff]
    %v506 = vld [vmem:[#allocation8 + $0x20] sm:$0xff]
    %v507 = vld [vmem:[#allocation8 + $0x28] sm:$0xff]
    %v508 = vld [vmem:[#allocation8 + $0x30] sm:$0xff]
    %v509 = vld [vmem:[#allocation8 + $0x38] sm:$0xff]
    %v510 = vld [vmem:[#allocation8 + $0x40] sm:$0xff]
    %v511 = vld [vmem:[#allocation8 + $0x48] sm:$0xff]
    %v512 = vld [vmem:[#allocation8 + $0x50] sm:$0xff]
    %v513 = vld [vmem:[#allocation8 + $0x58] sm:$0xff]
    %v514 = vld [vmem:[#allocation8 + $0x60] sm:$0xff]
    %v515 = vld [vmem:[#allocation8 + $0x68] sm:$0xff]
    %v516 = vld [vmem:[#allocation8 + $0x70] sm:$0xff]
    %v517 = vld [vmem:[#allocation8 + $0x78] sm:$0xff]
    %s518 = sld [smem:[#allocation2]]
    %v519 = vstv %s518
    %vm522 = vcmask 1041409
    %v523 = vsel %vm522, %v501, %v500
    %525 = vmatpush.msra.mxu0 %v517
    %526 = vmatpush.msra.mxu0 %v516
    %527 = vmatpush.msra.mxu0 %v515
    %528 = vmatpush.msra.mxu0 %v514
    %529 = vmatpush.msra.mxu0 %v513
    %530 = vmatpush.msra.mxu0 %v512
    %531 = vmatpush.msra.mxu0 %v511
    %532 = vmatpush.msra.mxu0 %v510
    %533 = vmatpush.msra.mxu0 %v509
    %534 = vmatpush.msra.mxu0 %v508
    %535 = vmatpush.msra.mxu0 %v507
    %536 = vmatpush.msra.mxu0 %v506
    %537 = vmatpush.msra.mxu0 %v505
    %538 = vmatpush.msra.mxu0 %v504
    %539 = vmatpush.msra.mxu0 %v503
    %540 = vmatpush.msra.mxu0 %v502
    %541 = vmatmul.f32.gmra.mxu0 %v523
    %v542 = vpop.f32.mrf.mxu0
    %v543 = vadd.f32 %v519, %v542
    %544 = vdwg.mxu0
    %545 = vst [vmem:[#allocation9] sm:$0x3] %v543
    // Predicated region
    $region34: #{tpu_custom_call.1} parent=1 // pred_check
      _
    $region35: #{tpu_custom_call.1} parent=1 // pred_check_branch
      %547 = sbr.rel (0) target = $region37
    $region36: #{tpu_custom_call.1} parent=1 // pred_region
      %549 = vsyncadd [#allocation5], 0
      %s551 = sshll.u32 [#allocation9], 4
      %s552 = int_to_ptr.vmem [resolvable:$true] %s551
      %s553 = sshll.u32 %s5, 4
      %s554 = int_to_ptr.hbm [resolvable:$true] %s553
      %556 = dma.vmem_to_hbm [thread:$0]  %s552, 32, %s554, [#allocation5]
    $region37: #{tpu_custom_call.1} parent=1 // pred_fallthru
      _
    // Predicated region
    $region38: #{tpu_custom_call.1} parent=1 // pred_check
      _
    $region39: #{tpu_custom_call.1} parent=1 // pred_check_branch
      %558 = sbr.rel (0) target = $region41
    $region40: #{tpu_custom_call.1} parent=1 // pred_region
      %560 = dma.done [#allocation5], 32
    $region41: #{tpu_custom_call.1} parent=1 // pred_fallthru
      _
    %561 = vsyncpa [#allocation4], 1
    %562 = vsyncpa [#allocation7], 1
    %563 = vsyncpa [#allocation5], 1

</llo_original>
